<compile_context>
chip_gen: v6e
topology: v6e:2x2x1
jax: 0.10.0
libtpu: 0.0.40
codegen_flags: <defaults>
</compile_context>

<pallas_src>
import functools
import math

import jax
import jax.numpy as jnp
from jax.experimental import pallas as pl
from jax.experimental.pallas import tpu as pltpu

LOG_STD_MIN = -5.0
LOG_STD_MAX = 0.0
_HALF_LOG_2PI = 0.5 * math.log(2.0 * math.pi)
_EPS = 1e-6


def _round_up(x, m):
    return ((x + m - 1) // m) * m


def _sac_actor_kernel(x_ref, eps_ref,
                      w1_ref, b1_ref, w2_ref, b2_ref, w3_ref, b3_ref,
                      wh_ref, bh_ref,
                      act_ref, lp_ref, *, ap):
    # ---- hidden MLP: bf16 operands, f32 accumulation on the MXU ----
    h = jnp.dot(x_ref[...], w1_ref[...], preferred_element_type=jnp.float32) + b1_ref[...]
    h = jnp.maximum(h, 0.0).astype(jnp.bfloat16)
    h = jnp.dot(h, w2_ref[...], preferred_element_type=jnp.float32) + b2_ref[...]
    h = jnp.maximum(h, 0.0).astype(jnp.bfloat16)
    h = jnp.dot(h, w3_ref[...], preferred_element_type=jnp.float32) + b3_ref[...]
    h = jnp.maximum(h, 0.0).astype(jnp.bfloat16)

    # ---- fused heads: [W_mu | W_sig] in one MXU matmul, split on 128-lane boundary ----
    heads = jnp.dot(h, wh_ref[...], preferred_element_type=jnp.float32) + bh_ref[...]
    mu = heads[:, :ap]
    log_std = jnp.clip(heads[:, ap:], LOG_STD_MIN, LOG_STD_MAX)     # f32 clamp
    std = jnp.exp(log_std)                                           # EUP, f32

    # ---- reparameterized sample + tanh squash + log-prob (all fused) ----
    eps = eps_ref[...].astype(jnp.float32)
    a = mu + std * eps                                               # dist.rsample()
    t = jnp.tanh(a)                                                  # action.tanh()

    # Normal(mu, std).log_prob(a) with (a - mu) / std == eps
    lp = -0.5 * eps * eps - log_std - _HALF_LOG_2PI
    lp = lp - jnp.log(1.0 - t * t + _EPS)                            # squash correction

    act_ref[...] = t.astype(act_ref.dtype)
    lp_ref[...] = lp.astype(lp_ref.dtype)


def sac_actor_forward(params, state, eps, *, tb=128):
    """Fused SACActor forward (continuous path, sample=True via `eps`)."""
    B, state_dim = state.shape
    input_layer = params["w1"].shape[0]      # PyTorch layout (out, in)
    actor_hidden = params["w3"].shape[0]
    action_dim = params["wmu"].shape[0]

    # Lane-aligned padded sizes.
    SP = _round_up(state_dim, 128)
    H1 = _round_up(input_layer, 128)
    H2 = _round_up(actor_hidden, 128)
    AP = _round_up(action_dim, 128)

    # Adaptive batch tile: avoid padding a tiny batch up to 128 rows.
    BP8 = _round_up(max(B, 1), 8)
    if BP8 <= tb:
        TB = BP8
        BP = BP8
    else:
        TB = tb
        BP = _round_up(B, tb)

    def prep_w(w, rows, cols):   # (out, in) -> padded (in_pad, out_pad) bf16, transposed ONCE here
        wt = jnp.transpose(w)
        wt = jnp.pad(wt, ((0, rows - wt.shape[0]), (0, cols - wt.shape[1])))
        return wt.astype(jnp.bfloat16)

    def prep_b(b, cols):         # (out,) -> (1, out_pad) f32 (added after f32 accumulation)
        return jnp.pad(b, (0, cols - b.shape[0])).reshape(1, cols).astype(jnp.float32)

    w1, b1 = prep_w(params["w1"], SP, H1), prep_b(params["b1"], H1)
    w2, b2 = prep_w(params["w2"], H1, H2), prep_b(params["b2"], H2)
    w3, b3 = prep_w(params["w3"], H2, H2), prep_b(params["b3"], H2)
    # Fused heads: columns [0, AP) = mu, [AP, 2*AP) = log_std.
    wh = jnp.concatenate([prep_w(params["wmu"], H2, AP),
                          prep_w(params["wsg"], H2, AP)], axis=1)
    bh = jnp.concatenate([prep_b(params["bmu"], AP),
                          prep_b(params["bsg"], AP)], axis=1)

    xp = jnp.pad(state.astype(jnp.float32),
                 ((0, BP - B), (0, SP - state_dim))).astype(jnp.bfloat16)
    ep = jnp.pad(eps.astype(jnp.float32),
                 ((0, BP - B), (0, AP - action_dim)))

    batch_spec = lambda feat: pl.BlockSpec((TB, feat), lambda i: (i, 0))
    const_spec = lambda shape: pl.BlockSpec(shape, lambda i: (0, 0))   # resident in VMEM

    kernel = functools.partial(_sac_actor_kernel, ap=AP)

    act_p, lp_p = pl.pallas_call(
        kernel,
        out_shape=(jax.ShapeDtypeStruct((BP, AP), jnp.float32),
                   jax.ShapeDtypeStruct((BP, AP), jnp.float32)),
        grid_spec=pltpu.PrefetchScalarGridSpec(
            num_scalar_prefetch=0,
            grid=(BP // TB,),
            in_specs=[
                batch_spec(SP),                                  # state tile
                batch_spec(AP),                                  # eps tile
                const_spec((SP, H1)), const_spec((1, H1)),       # layer1
                const_spec((H1, H2)), const_spec((1, H2)),       # layer2
                const_spec((H2, H2)), const_spec((1, H2)),       # layer3
                const_spec((H2, 2 * AP)), const_spec((1, 2 * AP)),  # fused mu|sig heads
            ],
            out_specs=[batch_spec(AP), batch_spec(AP)],
        ),
        compiler_params=pltpu.CompilerParams(
            dimension_semantics=("parallel",),                   # batch sharded across TCs on v7x
        ),
    )(xp, ep, w1, b1, w2, b2, w3, b3, wh, bh)

    return act_p[:B, :action_dim], lp_p[:B, :action_dim]


def sac_actor_reference(params, state, eps):
    """Pure-JAX reference matching the kernel's bf16-operand / f32-acc math."""
    def lin(x, w, b):
        return jnp.dot(x.astype(jnp.bfloat16), w.T.astype(jnp.bfloat16),
                       preferred_element_type=jnp.float32) + b.astype(jnp.float32)
    h = jax.nn.relu(lin(state, params["w1"], params["b1"]))
    h = jax.nn.relu(lin(h, params["w2"], params["b2"]))
    h = jax.nn.relu(lin(h, params["w3"], params["b3"]))
    mu = lin(h, params["wmu"], params["bmu"])
    log_std = jnp.clip(lin(h, params["wsg"], params["bsg"]), LOG_STD_MIN, LOG_STD_MAX)
    std = jnp.exp(log_std)
    a = mu + std * eps
    t = jnp.tanh(a)
    lp = -0.5 * eps * eps - log_std - _HALF_LOG_2PI - jnp.log(1.0 - t * t + _EPS)
    return t, lp


def init_sac_actor_params(key, state_dim, input_layer, actor_hidden, action_dim):
    """Xavier-normal weights (PyTorch (out, in) layout), small biases."""
    def xavier(k, fan_in, fan_out):
        std = math.sqrt(2.0 / (fan_in + fan_out))
        return std * jax.random.normal(k, (fan_out, fan_in), jnp.float32)
    ks = jax.random.split(key, 10)
    return {
        "w1": xavier(ks[0], state_dim, input_layer),
        "b1": 0.05 * jax.random.normal(ks[1], (input_layer,), jnp.float32),
        "w2": xavier(ks[2], input_layer, actor_hidden),
        "b2": 0.05 * jax.random.normal(ks[3], (actor_hidden,), jnp.float32),
        "w3": xavier(ks[4], actor_hidden, actor_hidden),
        "b3": 0.05 * jax.random.normal(ks[5], (actor_hidden,), jnp.float32),
        "wmu": xavier(ks[6], actor_hidden, action_dim),
        "bmu": 0.05 * jax.random.normal(ks[7], (action_dim,), jnp.float32),
        "wsg": xavier(ks[8], actor_hidden, action_dim),
        "bsg": 0.05 * jax.random.normal(ks[9], (action_dim,), jnp.float32),
    }


# TODO(synk): discrete branch (Categorical / gumbel-softmax) and the Conv /
# recurrent layer1 variants for image/sequence observations are not implemented;
# only the continuous vector-observation Normal path is translated.

if __name__ == "__main__":
    key = jax.random.PRNGKey(0)
    k_param, k_state, k_eps = jax.random.split(key, 3)

    batch, state_dim, input_layer, actor_hidden, action_dim = 32, 17, 64, 64, 6
    params = init_sac_actor_params(k_param, state_dim, input_layer, actor_hidden, action_dim)
    state = jax.random.normal(k_state, (batch, state_dim), jnp.float32)
    eps = jax.random.normal(k_eps, (batch, action_dim), jnp.float32)  # rsample noise (sample=True)

    fwd = jax.jit(functools.partial(sac_actor_forward, tb=128))
    action_out, log_prob = jax.block_until_ready(fwd(params, state, eps))

    ref_act, ref_lp = sac_actor_reference(params, state, eps)
    assert action_out.shape == (batch, action_dim)
    assert log_prob.shape == (batch, action_dim)
    assert bool(jnp.all(jnp.isfinite(action_out))) and bool(jnp.all(jnp.isfinite(log_prob)))
    assert bool(jnp.allclose(action_out, ref_act, atol=2e-2, rtol=2e-2))
    assert bool(jnp.allclose(log_prob, ref_lp, atol=5e-2, rtol=5e-2))

    print("KERNEL_OK")
</pallas_src>

<mosaic_0001>
module attributes {stable_mosaic.version = 11 : i64} {
  func.func @_sac_actor_kernel(%arg0: i32, %arg1: memref<32x128xbf16, #tpu.memory_space<vmem>>, %arg2: memref<32x128xf32, #tpu.memory_space<vmem>>, %arg3: memref<128x128xbf16, #tpu.memory_space<vmem>>, %arg4: memref<1x128xf32, #tpu.memory_space<vmem>>, %arg5: memref<128x128xbf16, #tpu.memory_space<vmem>>, %arg6: memref<1x128xf32, #tpu.memory_space<vmem>>, %arg7: memref<128x128xbf16, #tpu.memory_space<vmem>>, %arg8: memref<1x128xf32, #tpu.memory_space<vmem>>, %arg9: memref<128x256xbf16, #tpu.memory_space<vmem>>, %arg10: memref<1x256xf32, #tpu.memory_space<vmem>>, %arg11: memref<32x128xf32, #tpu.memory_space<vmem>>, %arg12: memref<32x128xf32, #tpu.memory_space<vmem>>) attributes {dimension_semantics = [#tpu.dimension_semantics<parallel>], iteration_bounds = array<i64: 1>, scalar_prefetch = 0 : i64, scratch_operands = 0 : i64, tpu.core_type = #tpu.core_type<tc>, window_params = [{transform_indices = @transform_0, window_bounds = array<i64: 32, 128>}, {transform_indices = @transform_1, window_bounds = array<i64: 32, 128>}, {pipeline_mode = #tpu.pipeline_mode<synchronous>, transform_indices = @transform_2, window_bounds = array<i64: 128, 128>}, {pipeline_mode = #tpu.pipeline_mode<synchronous>, transform_indices = @transform_3, window_bounds = array<i64: 1, 128>}, {pipeline_mode = #tpu.pipeline_mode<synchronous>, transform_indices = @transform_4, window_bounds = array<i64: 128, 128>}, {pipeline_mode = #tpu.pipeline_mode<synchronous>, transform_indices = @transform_5, window_bounds = array<i64: 1, 128>}, {pipeline_mode = #tpu.pipeline_mode<synchronous>, transform_indices = @transform_6, window_bounds = array<i64: 128, 128>}, {pipeline_mode = #tpu.pipeline_mode<synchronous>, transform_indices = @transform_7, window_bounds = array<i64: 1, 128>}, {pipeline_mode = #tpu.pipeline_mode<synchronous>, transform_indices = @transform_8, window_bounds = array<i64: 128, 256>}, {pipeline_mode = #tpu.pipeline_mode<synchronous>, transform_indices = @transform_9, window_bounds = array<i64: 1, 256>}, {transform_indices = @transform_10, window_bounds = array<i64: 32, 128>}, {transform_indices = @transform_11, window_bounds = array<i64: 32, 128>}]} {
    %c0 = arith.constant 0 : index
    %c0_0 = arith.constant 0 : index
    %0 = vector.load %arg1[%c0, %c0_0] : memref<32x128xbf16, #tpu.memory_space<vmem>>, vector<32x128xbf16>
    %c0_1 = arith.constant 0 : index
    %c0_2 = arith.constant 0 : index
    %1 = vector.load %arg3[%c0_1, %c0_2] : memref<128x128xbf16, #tpu.memory_space<vmem>>, vector<128x128xbf16>
    %cst = arith.constant dense<0.000000e+00> : vector<32x128xf32>
    %2 = tpu.matmul %0, %1, %cst {dimension_numbers = #tpu.dot_dimension_numbers<[1], [0], [0], [1], [0, 0, 1, 1], [], []>} : vector<32x128xbf16>, vector<128x128xbf16>, vector<32x128xf32> -> vector<32x128xf32>
    %c0_3 = arith.constant 0 : index
    %c0_4 = arith.constant 0 : index
    %3 = vector.load %arg4[%c0_3, %c0_4] : memref<1x128xf32, #tpu.memory_space<vmem>>, vector<1x128xf32>
    %4 = vector.broadcast %3 : vector<1x128xf32> to vector<32x128xf32>
    %5 = arith.addf %2, %4 : vector<32x128xf32>
    %cst_5 = arith.constant 0.000000e+00 : f32
    %6 = vector.broadcast %cst_5 : f32 to vector<32x128xf32>
    %7 = arith.maximumf %5, %6 : vector<32x128xf32>
    %8 = arith.truncf %7 : vector<32x128xf32> to vector<32x128xbf16>
    %c0_6 = arith.constant 0 : index
    %c0_7 = arith.constant 0 : index
    %9 = vector.load %arg5[%c0_6, %c0_7] : memref<128x128xbf16, #tpu.memory_space<vmem>>, vector<128x128xbf16>
    %cst_8 = arith.constant dense<0.000000e+00> : vector<32x128xf32>
    %10 = tpu.matmul %8, %9, %cst_8 {dimension_numbers = #tpu.dot_dimension_numbers<[1], [0], [0], [1], [0, 0, 1, 1], [], []>} : vector<32x128xbf16>, vector<128x128xbf16>, vector<32x128xf32> -> vector<32x128xf32>
    %c0_9 = arith.constant 0 : index
    %c0_10 = arith.constant 0 : index
    %11 = vector.load %arg6[%c0_9, %c0_10] : memref<1x128xf32, #tpu.memory_space<vmem>>, vector<1x128xf32>
    %12 = vector.broadcast %11 : vector<1x128xf32> to vector<32x128xf32>
    %13 = arith.addf %10, %12 : vector<32x128xf32>
    %cst_11 = arith.constant 0.000000e+00 : f32
    %14 = vector.broadcast %cst_11 : f32 to vector<32x128xf32>
    %15 = arith.maximumf %13, %14 : vector<32x128xf32>
    %16 = arith.truncf %15 : vector<32x128xf32> to vector<32x128xbf16>
    %c0_12 = arith.constant 0 : index
    %c0_13 = arith.constant 0 : index
    %17 = vector.load %arg7[%c0_12, %c0_13] : memref<128x128xbf16, #tpu.memory_space<vmem>>, vector<128x128xbf16>
    %cst_14 = arith.constant dense<0.000000e+00> : vector<32x128xf32>
    %18 = tpu.matmul %16, %17, %cst_14 {dimension_numbers = #tpu.dot_dimension_numbers<[1], [0], [0], [1], [0, 0, 1, 1], [], []>} : vector<32x128xbf16>, vector<128x128xbf16>, vector<32x128xf32> -> vector<32x128xf32>
    %c0_15 = arith.constant 0 : index
    %c0_16 = arith.constant 0 : index
    %19 = vector.load %arg8[%c0_15, %c0_16] : memref<1x128xf32, #tpu.memory_space<vmem>>, vector<1x128xf32>
    %20 = vector.broadcast %19 : vector<1x128xf32> to vector<32x128xf32>
    %21 = arith.addf %18, %20 : vector<32x128xf32>
    %cst_17 = arith.constant 0.000000e+00 : f32
    %22 = vector.broadcast %cst_17 : f32 to vector<32x128xf32>
    %23 = arith.maximumf %21, %22 : vector<32x128xf32>
    %24 = arith.truncf %23 : vector<32x128xf32> to vector<32x128xbf16>
    %c0_18 = arith.constant 0 : index
    %c0_19 = arith.constant 0 : index
    %25 = vector.load %arg9[%c0_18, %c0_19] : memref<128x256xbf16, #tpu.memory_space<vmem>>, vector<128x256xbf16>
    %cst_20 = arith.constant dense<0.000000e+00> : vector<32x256xf32>
    %26 = tpu.matmul %24, %25, %cst_20 {dimension_numbers = #tpu.dot_dimension_numbers<[1], [0], [0], [1], [0, 0, 1, 1], [], []>} : vector<32x128xbf16>, vector<128x256xbf16>, vector<32x256xf32> -> vector<32x256xf32>
    %c0_21 = arith.constant 0 : index
    %c0_22 = arith.constant 0 : index
    %27 = vector.load %arg10[%c0_21, %c0_22] : memref<1x256xf32, #tpu.memory_space<vmem>>, vector<1x256xf32>
    %28 = vector.broadcast %27 : vector<1x256xf32> to vector<32x256xf32>
    %29 = arith.addf %26, %28 : vector<32x256xf32>
    %30 = vector.extract_strided_slice %29 {offsets = [0, 0], sizes = [32, 128], strides = [1, 1]} : vector<32x256xf32> to vector<32x128xf32>
    %31 = vector.extract_strided_slice %29 {offsets = [0, 128], sizes = [32, 128], strides = [1, 1]} : vector<32x256xf32> to vector<32x128xf32>
    %cst_23 = arith.constant -5.000000e+00 : f32
    %cst_24 = arith.constant 0.000000e+00 : f32
    %32 = vector.broadcast %cst_23 : f32 to vector<32x128xf32>
    %33 = arith.maximumf %32, %31 : vector<32x128xf32>
    %34 = vector.broadcast %cst_24 : f32 to vector<32x128xf32>
    %35 = arith.minimumf %34, %33 : vector<32x128xf32>
    %36 = math.exp %35 : vector<32x128xf32>
    %c0_25 = arith.constant 0 : index
    %c0_26 = arith.constant 0 : index
    %37 = vector.load %arg2[%c0_25, %c0_26] : memref<32x128xf32, #tpu.memory_space<vmem>>, vector<32x128xf32>
    %38 = arith.mulf %36, %37 : vector<32x128xf32>
    %39 = arith.addf %30, %38 : vector<32x128xf32>
    %40 = math.tanh %39 : vector<32x128xf32>
    %cst_27 = arith.constant -5.000000e-01 : f32
    %41 = vector.broadcast %cst_27 : f32 to vector<32x128xf32>
    %42 = arith.mulf %41, %37 : vector<32x128xf32>
    %43 = arith.mulf %42, %37 : vector<32x128xf32>
    %44 = arith.subf %43, %35 : vector<32x128xf32>
    %cst_28 = arith.constant 0.918938517 : f32
    %45 = vector.broadcast %cst_28 : f32 to vector<32x128xf32>
    %46 = arith.subf %44, %45 : vector<32x128xf32>
    %47 = arith.mulf %40, %40 : vector<32x128xf32>
    %cst_29 = arith.constant 1.000000e+00 : f32
    %48 = vector.broadcast %cst_29 : f32 to vector<32x128xf32>
    %49 = arith.subf %48, %47 : vector<32x128xf32>
    %cst_30 = arith.constant 9.99999997E-7 : f32
    %50 = vector.broadcast %cst_30 : f32 to vector<32x128xf32>
    %51 = arith.addf %49, %50 : vector<32x128xf32>
    %52 = math.log %51 : vector<32x128xf32>
    %53 = arith.subf %46, %52 : vector<32x128xf32>
    %c0_31 = arith.constant 0 : index
    %c0_32 = arith.constant 0 : index
    %54 = vector.load %arg11[%c0_31, %c0_32] : memref<32x128xf32, #tpu.memory_space<vmem>>, vector<32x128xf32>
    tpu.vector_store %arg11[%c0_31, %c0_32], %40 {strides = array<i32>} : memref<32x128xf32, #tpu.memory_space<vmem>>, vector<32x128xf32>,
    %c0_33 = arith.constant 0 : index
    %c0_34 = arith.constant 0 : index
    %55 = vector.load %arg12[%c0_33, %c0_34] : memref<32x128xf32, #tpu.memory_space<vmem>>, vector<32x128xf32>
    tpu.vector_store %arg12[%c0_33, %c0_34], %53 {strides = array<i32>} : memref<32x128xf32, #tpu.memory_space<vmem>>, vector<32x128xf32>,
    return
  }
  func.func @transform_0(%arg0: i32) -> (i32, i32) {
    %c0_i32 = arith.constant 0 : i32
    %c0_i32_0 = arith.constant 0 : i32
    return %arg0, %c0_i32 : i32, i32
  }
  func.func @transform_1(%arg0: i32) -> (i32, i32) {
    %c0_i32 = arith.constant 0 : i32
    %c0_i32_0 = arith.constant 0 : i32
    return %arg0, %c0_i32 : i32, i32
  }
  func.func @transform_2(%arg0: i32) -> (i32, i32) {
    %c0_i32 = arith.constant 0 : i32
    %c0_i32_0 = arith.constant 0 : i32
    %c0_i32_1 = arith.constant 0 : i32
    return %c0_i32, %c0_i32_0 : i32, i32
  }
  func.func @transform_3(%arg0: i32) -> (i32, i32) {
    %c0_i32 = arith.constant 0 : i32
    %c0_i32_0 = arith.constant 0 : i32
    %c0_i32_1 = arith.constant 0 : i32
    return %c0_i32, %c0_i32_0 : i32, i32
  }
  func.func @transform_4(%arg0: i32) -> (i32, i32) {
    %c0_i32 = arith.constant 0 : i32
    %c0_i32_0 = arith.constant 0 : i32
    %c0_i32_1 = arith.constant 0 : i32
    return %c0_i32, %c0_i32_0 : i32, i32
  }
  func.func @transform_5(%arg0: i32) -> (i32, i32) {
    %c0_i32 = arith.constant 0 : i32
    %c0_i32_0 = arith.constant 0 : i32
    %c0_i32_1 = arith.constant 0 : i32
    return %c0_i32, %c0_i32_0 : i32, i32
  }
  func.func @transform_6(%arg0: i32) -> (i32, i32) {
    %c0_i32 = arith.constant 0 : i32
    %c0_i32_0 = arith.constant 0 : i32
    %c0_i32_1 = arith.constant 0 : i32
    return %c0_i32, %c0_i32_0 : i32, i32
  }
  func.func @transform_7(%arg0: i32) -> (i32, i32) {
    %c0_i32 = arith.constant 0 : i32
    %c0_i32_0 = arith.constant 0 : i32
    %c0_i32_1 = arith.constant 0 : i32
    return %c0_i32, %c0_i32_0 : i32, i32
  }
  func.func @transform_8(%arg0: i32) -> (i32, i32) {
    %c0_i32 = arith.constant 0 : i32
    %c0_i32_0 = arith.constant 0 : i32
    %c0_i32_1 = arith.constant 0 : i32
    return %c0_i32, %c0_i32_0 : i32, i32
  }
  func.func @transform_9(%arg0: i32) -> (i32, i32) {
    %c0_i32 = arith.constant 0 : i32
    %c0_i32_0 = arith.constant 0 : i32
    %c0_i32_1 = arith.constant 0 : i32
    return %c0_i32, %c0_i32_0 : i32, i32
  }
  func.func @transform_10(%arg0: i32) -> (i32, i32) {
    %c0_i32 = arith.constant 0 : i32
    %c0_i32_0 = arith.constant 0 : i32
    return %arg0, %c0_i32 : i32, i32
  }
  func.func @transform_11(%arg0: i32) -> (i32, i32) {
    %c0_i32 = arith.constant 0 : i32
    %c0_i32_0 = arith.constant 0 : i32
    return %arg0, %c0_i32 : i32, i32
  }
}

</mosaic_0001>

<llo_original>
// kernel: sac_actor_forward.1
$region0: #{sac_actor_forward.1}
  #allocation0 [shape = 'u32[]', space=smem, size = 0x4, offset = 0x4, fixed_abs, tag = 'smem constant byte address 0x4 - core index']
  #allocation1 [shape = 'u32[144,128]{1,0:T(1,128)}', space=vmem, size = 0x12000, scoped, tag = 'internal scratch']
  %s0 = inlined_call_operand.vmem [shape: bf16[32,128], index: 0, kind: input, shape index: {}]
  %s1 = inlined_call_operand.vmem [shape: f32[32,128], index: 1, kind: input, shape index: {}]
  %s2 = inlined_call_operand.vmem [shape: bf16[128,128], index: 2, kind: input, shape index: {}]
  %s3 = inlined_call_operand.vmem [shape: f32[1,128], index: 3, kind: input, shape index: {}]
  %s4 = inlined_call_operand.vmem [shape: bf16[128,128], index: 4, kind: input, shape index: {}]
  %s5 = inlined_call_operand.vmem [shape: f32[1,128], index: 5, kind: input, shape index: {}]
  %s6 = inlined_call_operand.vmem [shape: bf16[128,128], index: 6, kind: input, shape index: {}]
  %s7 = inlined_call_operand.vmem [shape: f32[1,128], index: 7, kind: input, shape index: {}]
  %s8 = inlined_call_operand.vmem [shape: bf16[128,256], index: 8, kind: input, shape index: {}]
  %s9 = inlined_call_operand.vmem [shape: f32[1,256], index: 9, kind: input, shape index: {}]
  %s10 = inlined_call_operand.vmem [shape: f32[32,128], index: 10, kind: output, shape index: {0}]
  %s11 = inlined_call_operand.vmem [shape: f32[32,128], index: 11, kind: output, shape index: {1}]
  %12 = xla_tuple %s10, %s11
  %s13 = sld [smem:[#allocation0]]
  $region58: #{sac_actor_forward.1} parent=0
    _
  %s15 = ssub.s32 1, %s13
  %s16 = scalar_select 0, %s15, %s13
  // Predicated region
  $region2: #{sac_actor_forward.1} parent=0 // pred_check
    _
  $region3: #{sac_actor_forward.1} parent=0 // pred_check_branch
    %18 = sbr.rel (0) target = $region5
  $region4: #{sac_actor_forward.1} parent=0 // pred_region
    _
  $region5: #{sac_actor_forward.1} parent=0 // pred_fallthru
    _
  // Predicated region
  $region6: #{sac_actor_forward.1} parent=0 // pred_check
    _
  $region7: #{sac_actor_forward.1} parent=0 // pred_check_branch
    %20 = sbr.rel (0) target = $region9
  $region8: #{sac_actor_forward.1} parent=0 // pred_region
    _
  $region9: #{sac_actor_forward.1} parent=0 // pred_fallthru
    _
  // Predicated region
  $region10: #{sac_actor_forward.1} parent=0 // pred_check
    _
  $region11: #{sac_actor_forward.1} parent=0 // pred_check_branch
    %22 = sbr.rel (0) target = $region13
  $region12: #{sac_actor_forward.1} parent=0 // pred_region
    _
  $region13: #{sac_actor_forward.1} parent=0 // pred_fallthru
    _
  // Predicated region
  $region14: #{sac_actor_forward.1} parent=0 // pred_check
    _
  $region15: #{sac_actor_forward.1} parent=0 // pred_check_branch
    %24 = sbr.rel (0) target = $region17
  $region16: #{sac_actor_forward.1} parent=0 // pred_region
    _
  $region17: #{sac_actor_forward.1} parent=0 // pred_fallthru
    _
  // Predicated region
  $region18: #{sac_actor_forward.1} parent=0 // pred_check
    _
  $region19: #{sac_actor_forward.1} parent=0 // pred_check_branch
    %26 = sbr.rel (0) target = $region21
  $region20: #{sac_actor_forward.1} parent=0 // pred_region
    _
  $region21: #{sac_actor_forward.1} parent=0 // pred_fallthru
    _
  // Predicated region
  $region22: #{sac_actor_forward.1} parent=0 // pred_check
    _
  $region23: #{sac_actor_forward.1} parent=0 // pred_check_branch
    %28 = sbr.rel (0) target = $region25
  $region24: #{sac_actor_forward.1} parent=0 // pred_region
    _
  $region25: #{sac_actor_forward.1} parent=0 // pred_fallthru
    _
  // Predicated region
  $region26: #{sac_actor_forward.1} parent=0 // pred_check
    _
  $region27: #{sac_actor_forward.1} parent=0 // pred_check_branch
    %30 = sbr.rel (0) target = $region29
  $region28: #{sac_actor_forward.1} parent=0 // pred_region
    _
  $region29: #{sac_actor_forward.1} parent=0 // pred_fallthru
    _
  // Predicated region
  $region30: #{sac_actor_forward.1} parent=0 // pred_check
    _
  $region31: #{sac_actor_forward.1} parent=0 // pred_check_branch
    %32 = sbr.rel (0) target = $region33
  $region32: #{sac_actor_forward.1} parent=0 // pred_region
    _
  $region33: #{sac_actor_forward.1} parent=0 // pred_fallthru
    _
  // Predicated region
  $region34: #{sac_actor_forward.1} parent=0 // pred_check
    _
  $region35: #{sac_actor_forward.1} parent=0 // pred_check_branch
    %34 = sbr.rel (0) target = $region37
  $region36: #{sac_actor_forward.1} parent=0 // pred_region
    _
  $region37: #{sac_actor_forward.1} parent=0 // pred_fallthru
    _
  // Predicated region
  $region38: #{sac_actor_forward.1} parent=0 // pred_check
    _
  $region39: #{sac_actor_forward.1} parent=0 // pred_check_branch
    %36 = sbr.rel (0) target = $region41
  $region40: #{sac_actor_forward.1} parent=0 // pred_region
    _
  $region41: #{sac_actor_forward.1} parent=0 // pred_fallthru
    _
  %v38 = vld [vmem:[%s0] sm:$0xf]
  %v39 = vld [vmem:[%s0 + $0x4] sm:$0xf]
  %v40 = vld [vmem:[%s0 + $0x8] sm:$0xf]
  %v41 = vld [vmem:[%s0 + $0xc] sm:$0xf]
  %v42 = vld [vmem:[%s2] sm:$0xf]
  %v43 = vld [vmem:[%s2 + $0x4] sm:$0xf]
  %v44 = vld [vmem:[%s2 + $0x8] sm:$0xf]
  %v45 = vld [vmem:[%s2 + $0xc] sm:$0xf]
  %v46 = vld [vmem:[%s2 + $0x10] sm:$0xf]
  %v47 = vld [vmem:[%s2 + $0x14] sm:$0xf]
  %v48 = vld [vmem:[%s2 + $0x18] sm:$0xf]
  %v49 = vld [vmem:[%s2 + $0x1c] sm:$0xf]
  %v50 = vld [vmem:[%s2 + $0x20] sm:$0xf]
  %v51 = vld [vmem:[%s2 + $0x24] sm:$0xf]
  %v52 = vld [vmem:[%s2 + $0x28] sm:$0xf]
  %v53 = vld [vmem:[%s2 + $0x2c] sm:$0xf]
  %v54 = vld [vmem:[%s2 + $0x30] sm:$0xf]
  %v55 = vld [vmem:[%s2 + $0x34] sm:$0xf]
  %v56 = vld [vmem:[%s2 + $0x38] sm:$0xf]
  %v57 = vld [vmem:[%s2 + $0x3c] sm:$0xf]
  %v58 = vld [vmem:[%s3] sm:$0x1]
  %v60 = vlaneseq
  %v61 = vshrl.u32 %v60, 7
  %v62 = vsub.s32 0, %v61
  %v63 = vrot.slane %v58, %v62
  %v69 = vunpack.c.l.b16 %v38
  %v70 = vunpack.c.l.b16 %v39
  %v71 = vunpack.c.l.b16 %v40
  %v72 = vunpack.c.l.b16 %v41
  %v73 = vpack.c.b16 %v70, %v69
  %v74 = vpack.c.b16 %v72, %v71
  %v93 = vunpack.c.l.b16 %v42
  %v94 = vunpack.c.l.b16 %v43
  %v95 = vunpack.c.l.b16 %v44
  %v96 = vunpack.c.l.b16 %v45
  %v97 = vunpack.c.l.b16 %v46
  %v98 = vunpack.c.l.b16 %v47
  %v99 = vunpack.c.l.b16 %v48
  %v100 = vunpack.c.l.b16 %v49
  %v101 = vunpack.c.l.b16 %v50
  %v102 = vunpack.c.l.b16 %v51
  %v103 = vunpack.c.l.b16 %v52
  %v104 = vunpack.c.l.b16 %v53
  %v105 = vunpack.c.l.b16 %v54
  %v106 = vunpack.c.l.b16 %v55
  %v107 = vunpack.c.l.b16 %v56
  %v108 = vunpack.c.l.b16 %v57
  %v109 = vpack.c.b16 %v94, %v93
  %v110 = vpack.c.b16 %v96, %v95
  %v111 = vpack.c.b16 %v98, %v97
  %v112 = vpack.c.b16 %v100, %v99
  %v113 = vpack.c.b16 %v102, %v101
  %v114 = vpack.c.b16 %v104, %v103
  %v115 = vpack.c.b16 %v106, %v105
  %v116 = vpack.c.b16 %v108, %v107
  %125 = vmatprep.subr.bf16.mxu0 0
  %126 = vmatpush1.bf16.msra.mxu0 %v116
  %127 = vmatprep.subr.bf16.mxu0 0
  %128 = vmatpush1.bf16.msra.mxu0 %v115
  %129 = vmatprep.subr.bf16.mxu0 0
  %130 = vmatpush1.bf16.msra.mxu0 %v114
  %131 = vmatprep.subr.bf16.mxu0 0
  %132 = vmatpush1.bf16.msra.mxu0 %v113
  %133 = vmatprep.subr.bf16.mxu0 0
  %134 = vmatpush1.bf16.msra.mxu0 %v112
  %135 = vmatprep.subr.bf16.mxu0 0
  %136 = vmatpush1.bf16.msra.mxu0 %v111
  %137 = vmatprep.subr.bf16.mxu0 0
  %138 = vmatpush1.bf16.msra.mxu0 %v110
  %139 = vmatprep.subr.bf16.mxu0 0
  %140 = vmatpush1.bf16.msra.mxu0 %v109
  %141 = vmatprep.subr.bf16.mxu0 0
  %142 = vmatpush2.bf16.msra.mxu0 0
  %143 = vmatprep.subr.bf16.mxu0 0
  %144 = vmatpush2.bf16.msra.mxu0 0
  %145 = vmatprep.subr.bf16.mxu0 0
  %146 = vmatpush2.bf16.msra.mxu0 0
  %147 = vmatprep.subr.bf16.mxu0 0
  %148 = vmatpush2.bf16.msra.mxu0 0
  %149 = vmatprep.subr.bf16.mxu0 0
  %150 = vmatpush2.bf16.msra.mxu0 0
  %151 = vmatprep.subr.bf16.mxu0 0
  %152 = vmatpush2.bf16.msra.mxu0 0
  %153 = vmatprep.subr.bf16.mxu0 0
  %154 = vmatpush2.bf16.msra.mxu0 0
  %155 = vmatprep.subr.bf16.mxu0 0
  %156 = vmatpush2.bf16.msra.mxu0 0
  %157 = vmatprep.mubr.bf16.mxu0 0
  %158 = vmatmul.mubr.bf16.gmra.mxu0 %v73
  %v159 = vpop.f32.mrf.mxu0
  %v160 = vadd.f32 %v63, %v159
  %v161 = vpop.f32.mrf.mxu0
  %v162 = vpop.f32.mrf.mxu0
  %v163 = vadd.f32 %v63, %v162
  %v164 = vpop.f32.mrf.mxu0
  %165 = vmatprep.mubr.bf16.mxu0 0
  %166 = vmatmul.mubr.bf16.gmra.mxu0 %v74
  %v167 = vpop.f32.mrf.mxu0
  %v168 = vadd.f32 %v63, %v167
  %v169 = vpop.f32.mrf.mxu0
  %v170 = vpop.f32.mrf.mxu0
  %v171 = vadd.f32 %v63, %v170
  %v172 = vpop.f32.mrf.mxu0
  %173 = vdwg.mxu0
  %v174 = vmax.f32 %v160, 0.0
  %v175 = vmax.f32 %v163, 0.0
  %v176 = vmax.f32 %v168, 0.0
  %v177 = vmax.f32 %v171, 0.0
  %v178 = vpack.c.bf16 %v175, %v174
  %v179 = vpack.c.bf16 %v177, %v176
  %v180 = vld [vmem:[%s4] sm:$0xf]
  %v181 = vld [vmem:[%s4 + $0x4] sm:$0xf]
  %v182 = vld [vmem:[%s4 + $0x8] sm:$0xf]
  %v183 = vld [vmem:[%s4 + $0xc] sm:$0xf]
  %v184 = vld [vmem:[%s4 + $0x10] sm:$0xf]
  %v185 = vld [vmem:[%s4 + $0x14] sm:$0xf]
  %v186 = vld [vmem:[%s4 + $0x18] sm:$0xf]
  %v187 = vld [vmem:[%s4 + $0x1c] sm:$0xf]
  %v188 = vld [vmem:[%s4 + $0x20] sm:$0xf]
  %v189 = vld [vmem:[%s4 + $0x24] sm:$0xf]
  %v190 = vld [vmem:[%s4 + $0x28] sm:$0xf]
  %v191 = vld [vmem:[%s4 + $0x2c] sm:$0xf]
  %v192 = vld [vmem:[%s4 + $0x30] sm:$0xf]
  %v193 = vld [vmem:[%s4 + $0x34] sm:$0xf]
  %v194 = vld [vmem:[%s4 + $0x38] sm:$0xf]
  %v195 = vld [vmem:[%s4 + $0x3c] sm:$0xf]
  %v196 = vld [vmem:[%s5] sm:$0x1]
  %v198 = vlaneseq
  %v199 = vshrl.u32 %v198, 7
  %v200 = vsub.s32 0, %v199
  %v201 = vrot.slane %v196, %v200
  %v219 = vunpack.c.l.b16 %v180
  %v220 = vunpack.c.l.b16 %v181
  %v221 = vunpack.c.l.b16 %v182
  %v222 = vunpack.c.l.b16 %v183
  %v223 = vunpack.c.l.b16 %v184
  %v224 = vunpack.c.l.b16 %v185
  %v225 = vunpack.c.l.b16 %v186
  %v226 = vunpack.c.l.b16 %v187
  %v227 = vunpack.c.l.b16 %v188
  %v228 = vunpack.c.l.b16 %v189
  %v229 = vunpack.c.l.b16 %v190
  %v230 = vunpack.c.l.b16 %v191
  %v231 = vunpack.c.l.b16 %v192
  %v232 = vunpack.c.l.b16 %v193
  %v233 = vunpack.c.l.b16 %v194
  %v234 = vunpack.c.l.b16 %v195
  %v235 = vpack.c.b16 %v220, %v219
  %v236 = vpack.c.b16 %v222, %v221
  %v237 = vpack.c.b16 %v224, %v223
  %v238 = vpack.c.b16 %v226, %v225
  %v239 = vpack.c.b16 %v228, %v227
  %v240 = vpack.c.b16 %v230, %v229
  %v241 = vpack.c.b16 %v232, %v231
  %v242 = vpack.c.b16 %v234, %v233
  %251 = vmatprep.subr.bf16.mxu0 0
  %252 = vmatpush1.bf16.msra.mxu0 %v242
  %253 = vmatprep.subr.bf16.mxu0 0
  %254 = vmatpush1.bf16.msra.mxu0 %v241
  %255 = vmatprep.subr.bf16.mxu0 0
  %256 = vmatpush1.bf16.msra.mxu0 %v240
  %257 = vmatprep.subr.bf16.mxu0 0
  %258 = vmatpush1.bf16.msra.mxu0 %v239
  %259 = vmatprep.subr.bf16.mxu0 0
  %260 = vmatpush1.bf16.msra.mxu0 %v238
  %261 = vmatprep.subr.bf16.mxu0 0
  %262 = vmatpush1.bf16.msra.mxu0 %v237
  %263 = vmatprep.subr.bf16.mxu0 0
  %264 = vmatpush1.bf16.msra.mxu0 %v236
  %265 = vmatprep.subr.bf16.mxu0 0
  %266 = vmatpush1.bf16.msra.mxu0 %v235
  %267 = vmatprep.subr.bf16.mxu0 0
  %268 = vmatpush2.bf16.msra.mxu0 0
  %269 = vmatprep.subr.bf16.mxu0 0
  %270 = vmatpush2.bf16.msra.mxu0 0
  %271 = vmatprep.subr.bf16.mxu0 0
  %272 = vmatpush2.bf16.msra.mxu0 0
  %273 = vmatprep.subr.bf16.mxu0 0
  %274 = vmatpush2.bf16.msra.mxu0 0
  %275 = vmatprep.subr.bf16.mxu0 0
  %276 = vmatpush2.bf16.msra.mxu0 0
  %277 = vmatprep.subr.bf16.mxu0 0
  %278 = vmatpush2.bf16.msra.mxu0 0
  %279 = vmatprep.subr.bf16.mxu0 0
  %280 = vmatpush2.bf16.msra.mxu0 0
  %281 = vmatprep.subr.bf16.mxu0 0
  %282 = vmatpush2.bf16.msra.mxu0 0
  %283 = vmatprep.mubr.bf16.mxu0 0
  %284 = vmatmul.mubr.bf16.gmra.mxu0 %v178
  %v285 = vpop.f32.mrf.mxu0
  %v286 = vadd.f32 %v201, %v285
  %v287 = vpop.f32.mrf.mxu0
  %v288 = vpop.f32.mrf.mxu0
  %v289 = vadd.f32 %v201, %v288
  %v290 = vpop.f32.mrf.mxu0
  %291 = vmatprep.mubr.bf16.mxu0 0
  %292 = vmatmul.mubr.bf16.gmra.mxu0 %v179
  %v293 = vpop.f32.mrf.mxu0
  %v294 = vadd.f32 %v201, %v293
  %v295 = vpop.f32.mrf.mxu0
  %v296 = vpop.f32.mrf.mxu0
  %v297 = vadd.f32 %v201, %v296
  %v298 = vpop.f32.mrf.mxu0
  %299 = vdwg.mxu0
  %v300 = vmax.f32 %v286, 0.0
  %v301 = vmax.f32 %v289, 0.0
  %v302 = vmax.f32 %v294, 0.0
  %v303 = vmax.f32 %v297, 0.0
  %v304 = vpack.c.bf16 %v301, %v300
  %v305 = vpack.c.bf16 %v303, %v302
  %v306 = vld [vmem:[%s6] sm:$0xf]
  %v307 = vld [vmem:[%s6 + $0x4] sm:$0xf]
  %v308 = vld [vmem:[%s6 + $0x8] sm:$0xf]
  %v309 = vld [vmem:[%s6 + $0xc] sm:$0xf]
  %v310 = vld [vmem:[%s6 + $0x10] sm:$0xf]
  %v311 = vld [vmem:[%s6 + $0x14] sm:$0xf]
  %v312 = vld [vmem:[%s6 + $0x18] sm:$0xf]
  %v313 = vld [vmem:[%s6 + $0x1c] sm:$0xf]
  %v314 = vld [vmem:[%s6 + $0x20] sm:$0xf]
  %v315 = vld [vmem:[%s6 + $0x24] sm:$0xf]
  %v316 = vld [vmem:[%s6 + $0x28] sm:$0xf]
  %v317 = vld [vmem:[%s6 + $0x2c] sm:$0xf]
  %v318 = vld [vmem:[%s6 + $0x30] sm:$0xf]
  %v319 = vld [vmem:[%s6 + $0x34] sm:$0xf]
  %v320 = vld [vmem:[%s6 + $0x38] sm:$0xf]
  %v321 = vld [vmem:[%s6 + $0x3c] sm:$0xf]
  %v322 = vld [vmem:[%s7] sm:$0x1]
  %v324 = vlaneseq
  %v325 = vshrl.u32 %v324, 7
  %v326 = vsub.s32 0, %v325
  %v327 = vrot.slane %v322, %v326
  %v345 = vunpack.c.l.b16 %v306
  %v346 = vunpack.c.l.b16 %v307
  %v347 = vunpack.c.l.b16 %v308
  %v348 = vunpack.c.l.b16 %v309
  %v349 = vunpack.c.l.b16 %v310
  %v350 = vunpack.c.l.b16 %v311
  %v351 = vunpack.c.l.b16 %v312
  %v352 = vunpack.c.l.b16 %v313
  %v353 = vunpack.c.l.b16 %v314
  %v354 = vunpack.c.l.b16 %v315
  %v355 = vunpack.c.l.b16 %v316
  %v356 = vunpack.c.l.b16 %v317
  %v357 = vunpack.c.l.b16 %v318
  %v358 = vunpack.c.l.b16 %v319
  %v359 = vunpack.c.l.b16 %v320
  %v360 = vunpack.c.l.b16 %v321
  %v361 = vpack.c.b16 %v346, %v345
  %v362 = vpack.c.b16 %v348, %v347
  %v363 = vpack.c.b16 %v350, %v349
  %v364 = vpack.c.b16 %v352, %v351
  %v365 = vpack.c.b16 %v354, %v353
  %v366 = vpack.c.b16 %v356, %v355
  %v367 = vpack.c.b16 %v358, %v357
  %v368 = vpack.c.b16 %v360, %v359
  %377 = vmatprep.subr.bf16.mxu0 0
  %378 = vmatpush1.bf16.msra.mxu0 %v368
  %379 = vmatprep.subr.bf16.mxu0 0
  %380 = vmatpush1.bf16.msra.mxu0 %v367
  %381 = vmatprep.subr.bf16.mxu0 0
  %382 = vmatpush1.bf16.msra.mxu0 %v366
  %383 = vmatprep.subr.bf16.mxu0 0
  %384 = vmatpush1.bf16.msra.mxu0 %v365
  %385 = vmatprep.subr.bf16.mxu0 0
  %386 = vmatpush1.bf16.msra.mxu0 %v364
  %387 = vmatprep.subr.bf16.mxu0 0
  %388 = vmatpush1.bf16.msra.mxu0 %v363
  %389 = vmatprep.subr.bf16.mxu0 0
  %390 = vmatpush1.bf16.msra.mxu0 %v362
  %391 = vmatprep.subr.bf16.mxu0 0
  %392 = vmatpush1.bf16.msra.mxu0 %v361
  %393 = vmatprep.subr.bf16.mxu0 0
  %394 = vmatpush2.bf16.msra.mxu0 0
  %395 = vmatprep.subr.bf16.mxu0 0
  %396 = vmatpush2.bf16.msra.mxu0 0
  %397 = vmatprep.subr.bf16.mxu0 0
  %398 = vmatpush2.bf16.msra.mxu0 0
  %399 = vmatprep.subr.bf16.mxu0 0
  %400 = vmatpush2.bf16.msra.mxu0 0
  %401 = vmatprep.subr.bf16.mxu0 0
  %402 = vmatpush2.bf16.msra.mxu0 0
  %403 = vmatprep.subr.bf16.mxu0 0
  %404 = vmatpush2.bf16.msra.mxu0 0
  %405 = vmatprep.subr.bf16.mxu0 0
  %406 = vmatpush2.bf16.msra.mxu0 0
  %407 = vmatprep.subr.bf16.mxu0 0
  %408 = vmatpush2.bf16.msra.mxu0 0
  %409 = vmatprep.mubr.bf16.mxu0 0
  %410 = vmatmul.mubr.bf16.gmra.mxu0 %v304
  %v411 = vpop.f32.mrf.mxu0
  %v412 = vadd.f32 %v327, %v411
  %v413 = vpop.f32.mrf.mxu0
  %v414 = vpop.f32.mrf.mxu0
  %v415 = vadd.f32 %v327, %v414
  %v416 = vpop.f32.mrf.mxu0
  %417 = vmatprep.mubr.bf16.mxu0 0
  %418 = vmatmul.mubr.bf16.gmra.mxu0 %v305
  %v419 = vpop.f32.mrf.mxu0
  %v420 = vadd.f32 %v327, %v419
  %v421 = vpop.f32.mrf.mxu0
  %v422 = vpop.f32.mrf.mxu0
  %v423 = vadd.f32 %v327, %v422
  %v424 = vpop.f32.mrf.mxu0
  %425 = vdwg.mxu0
  %v426 = vmax.f32 %v412, 0.0
  %v427 = vmax.f32 %v415, 0.0
  %v428 = vmax.f32 %v420, 0.0
  %v429 = vmax.f32 %v423, 0.0
  %v430 = vpack.c.bf16 %v427, %v426
  %v431 = vpack.c.bf16 %v429, %v428
  %v432 = vld [vmem:[%s8] sm:$0xff]
  %v433 = vld [vmem:[%s8 + $0x8] sm:$0xff]
  %v434 = vld [vmem:[%s8 + $0x10] sm:$0xff]
  %v435 = vld [vmem:[%s8 + $0x18] sm:$0xff]
  %v436 = vld [vmem:[%s8 + $0x20] sm:$0xff]
  %v437 = vld [vmem:[%s8 + $0x28] sm:$0xff]
  %v438 = vld [vmem:[%s8 + $0x30] sm:$0xff]
  %v439 = vld [vmem:[%s8 + $0x38] sm:$0xff]
  %v440 = vld [vmem:[%s8 + $0x40] sm:$0xff]
  %v441 = vld [vmem:[%s8 + $0x48] sm:$0xff]
  %v442 = vld [vmem:[%s8 + $0x50] sm:$0xff]
  %v443 = vld [vmem:[%s8 + $0x58] sm:$0xff]
  %v444 = vld [vmem:[%s8 + $0x60] sm:$0xff]
  %v445 = vld [vmem:[%s8 + $0x68] sm:$0xff]
  %v446 = vld [vmem:[%s8 + $0x70] sm:$0xff]
  %v447 = vld [vmem:[%s8 + $0x78] sm:$0xff]
  %v448 = vld [vmem:[%s9] sm:$0x3]
  %v450 = vlaneseq
  %v451 = vshrl.u32 %v450, 7
  %v452 = vsub.s32 0, %v451
  %v453 = vrot.slane %v448, %v452
  %v454 = vlaneseq
  %v455 = vshrl.u32 %v454, 7
  %v456 = vsub.s32 1, %v455
  %v457 = vrot.slane %v448, %v456
  %v476 = vunpack.c.l.b16 %v432
  %v477 = vunpack.c.h.b16 %v432
  %v478 = vunpack.c.l.b16 %v433
  %v479 = vunpack.c.h.b16 %v433
  %v480 = vunpack.c.l.b16 %v434
  %v481 = vunpack.c.h.b16 %v434
  %v482 = vunpack.c.l.b16 %v435
  %v483 = vunpack.c.h.b16 %v435
  %v484 = vunpack.c.l.b16 %v436
  %v485 = vunpack.c.h.b16 %v436
  %v486 = vunpack.c.l.b16 %v437
  %v487 = vunpack.c.h.b16 %v437
  %v488 = vunpack.c.l.b16 %v438
  %v489 = vunpack.c.h.b16 %v438
  %v490 = vunpack.c.l.b16 %v439
  %v491 = vunpack.c.h.b16 %v439
  %v492 = vunpack.c.l.b16 %v440
  %v493 = vunpack.c.h.b16 %v440
  %v494 = vunpack.c.l.b16 %v441
  %v495 = vunpack.c.h.b16 %v441
  %v496 = vunpack.c.l.b16 %v442
  %v497 = vunpack.c.h.b16 %v442
  %v498 = vunpack.c.l.b16 %v443
  %v499 = vunpack.c.h.b16 %v443
  %v500 = vunpack.c.l.b16 %v444
  %v501 = vunpack.c.h.b16 %v444
  %v502 = vunpack.c.l.b16 %v445
  %v503 = vunpack.c.h.b16 %v445
  %v504 = vunpack.c.l.b16 %v446
  %v505 = vunpack.c.h.b16 %v446
  %v506 = vunpack.c.l.b16 %v447
  %v507 = vunpack.c.h.b16 %v447
  %v508 = vpack.c.b16 %v478, %v476
  %v509 = vpack.c.b16 %v479, %v477
  %v510 = vpack.c.b16 %v482, %v480
  %v511 = vpack.c.b16 %v483, %v481
  %v512 = vpack.c.b16 %v486, %v484
  %v513 = vpack.c.b16 %v487, %v485
  %v514 = vpack.c.b16 %v490, %v488
  %v515 = vpack.c.b16 %v491, %v489
  %v516 = vpack.c.b16 %v494, %v492
  %v517 = vpack.c.b16 %v495, %v493
  %v518 = vpack.c.b16 %v498, %v496
  %v519 = vpack.c.b16 %v499, %v497
  %v520 = vpack.c.b16 %v502, %v500
  %v521 = vpack.c.b16 %v503, %v501
  %v522 = vpack.c.b16 %v506, %v504
  %v523 = vpack.c.b16 %v507, %v505
  %540 = vmatprep.subr.bf16.mxu0 %v523
  %541 = vmatpush1.bf16.msra.mxu0 %v522
  %542 = vmatprep.subr.bf16.mxu0 %v521
  %543 = vmatpush1.bf16.msra.mxu0 %v520
  %544 = vmatprep.subr.bf16.mxu0 %v519
  %545 = vmatpush1.bf16.msra.mxu0 %v518
  %546 = vmatprep.subr.bf16.mxu0 %v517
  %547 = vmatpush1.bf16.msra.mxu0 %v516
  %548 = vmatprep.subr.bf16.mxu0 %v515
  %549 = vmatpush1.bf16.msra.mxu0 %v514
  %550 = vmatprep.subr.bf16.mxu0 %v513
  %551 = vmatpush1.bf16.msra.mxu0 %v512
  %552 = vmatprep.subr.bf16.mxu0 %v511
  %553 = vmatpush1.bf16.msra.mxu0 %v510
  %554 = vmatprep.subr.bf16.mxu0 %v509
  %555 = vmatpush1.bf16.msra.mxu0 %v508
  %556 = vmatprep.subr.bf16.mxu0 0
  %557 = vmatpush2.bf16.msra.mxu0 0
  %558 = vmatprep.subr.bf16.mxu0 0
  %559 = vmatpush2.bf16.msra.mxu0 0
  %560 = vmatprep.subr.bf16.mxu0 0
  %561 = vmatpush2.bf16.msra.mxu0 0
  %562 = vmatprep.subr.bf16.mxu0 0
  %563 = vmatpush2.bf16.msra.mxu0 0
  %564 = vmatprep.subr.bf16.mxu0 0
  %565 = vmatpush2.bf16.msra.mxu0 0
  %566 = vmatprep.subr.bf16.mxu0 0
  %567 = vmatpush2.bf16.msra.mxu0 0
  %568 = vmatprep.subr.bf16.mxu0 0
  %569 = vmatpush2.bf16.msra.mxu0 0
  %570 = vmatprep.subr.bf16.mxu0 0
  %571 = vmatpush2.bf16.msra.mxu0 0
  %572 = vmatprep.mubr.bf16.mxu0 0
  %573 = vmatmul.mubr.bf16.gmra.mxu0 %v430
  %v574 = vpop.f32.mrf.mxu0
  %v575 = vadd.f32 %v453, %v574
  %v576 = vpop.f32.mrf.mxu0
  %v577 = vadd.f32 %v457, %v576
  %v578 = vpop.f32.mrf.mxu0
  %v579 = vadd.f32 %v453, %v578
  %v580 = vpop.f32.mrf.mxu0
  %v581 = vadd.f32 %v457, %v580
  %582 = vmatprep.mubr.bf16.mxu0 0
  %583 = vmatmul.mubr.bf16.gmra.mxu0 %v431
  %v584 = vpop.f32.mrf.mxu0
  %v585 = vadd.f32 %v453, %v584
  %v586 = vpop.f32.mrf.mxu0
  %v587 = vadd.f32 %v457, %v586
  %v588 = vpop.f32.mrf.mxu0
  %v589 = vadd.f32 %v453, %v588
  %v590 = vpop.f32.mrf.mxu0
  %v591 = vadd.f32 %v457, %v590
  %592 = vdwg.mxu0
  %v593 = vmax.f32 %v577, -5.0
  %v594 = vmax.f32 %v581, -5.0
  %v595 = vmax.f32 %v587, -5.0
  %v596 = vmax.f32 %v591, -5.0
  %v597 = vmin.f32 %v593, 0.0
  %v598 = vmin.f32 %v594, 0.0
  %v599 = vmin.f32 %v595, 0.0
  %v600 = vmin.f32 %v596, 0.0
  %v601 = vmul.f32 %v597, 1.442695
  %v602 = vpow.pop %v601
  %v603 = vmul.f32 %v598, 1.442695
  %v604 = vpow.pop %v603
  %v605 = vmul.f32 %v599, 1.442695
  %v606 = vpow.pop %v605
  %v607 = vmul.f32 %v600, 1.442695
  %v608 = vpow.pop %v607
  %v609 = vld [vmem:[%s1] sm:$0xff]
  %v610 = vld [vmem:[%s1 + $0x8] sm:$0xff]
  %v611 = vld [vmem:[%s1 + $0x10] sm:$0xff]
  %v612 = vld [vmem:[%s1 + $0x18] sm:$0xff]
  %v613 = vmul.f32 %v602, %v609
  %v614 = vmul.f32 %v604, %v610
  %v615 = vmul.f32 %v606, %v611
  %v616 = vmul.f32 %v608, %v612
  %v617 = vadd.f32 %v575, %v613
  %v618 = vadd.f32 %v579, %v614
  %v619 = vadd.f32 %v585, %v615
  %v620 = vadd.f32 %v589, %v616
  %v621 = vtanh.pop %v617
  %v622 = vtanh.pop %v618
  %v623 = vtanh.pop %v619
  %v624 = vtanh.pop %v620
  %v625 = vmul.f32 %v609, -0.5
  %v626 = vmul.f32 %v610, -0.5
  %v627 = vmul.f32 %v611, -0.5
  %v628 = vmul.f32 %v612, -0.5
  %v629 = vmul.f32 %v625, %v609
  %v630 = vmul.f32 %v626, %v610
  %v631 = vmul.f32 %v627, %v611
  %v632 = vmul.f32 %v628, %v612
  %v633 = vsub.f32 %v629, %v597
  %v634 = vsub.f32 %v630, %v598
  %v635 = vsub.f32 %v631, %v599
  %v636 = vsub.f32 %v632, %v600
  %v637 = vsub.f32 %v633, 0.9189385
  %v638 = vsub.f32 %v634, 0.9189385
  %v639 = vsub.f32 %v635, 0.9189385
  %v640 = vsub.f32 %v636, 0.9189385
  %v641 = vmul.f32 %v621, %v621
  %v642 = vmul.f32 %v622, %v622
  %v643 = vmul.f32 %v623, %v623
  %v644 = vmul.f32 %v624, %v624
  %v645 = vsub.f32 1.0, %v641
  %v646 = vsub.f32 1.0, %v642
  %v647 = vsub.f32 1.0, %v643
  %v648 = vsub.f32 1.0, %v644
  %v649 = vadd.f32 %v645, 1e-06
  %v650 = vadd.f32 %v646, 1e-06
  %v651 = vadd.f32 %v647, 1e-06
  %v652 = vadd.f32 %v648, 1e-06
  %v653 = vlog2.pop %v649
  %v654 = vmul.f32 %v653, 0.6931472
  %v655 = vlog2.pop %v650
  %v656 = vmul.f32 %v655, 0.6931472
  %v657 = vlog2.pop %v651
  %v658 = vmul.f32 %v657, 0.6931472
  %v659 = vlog2.pop %v652
  %v660 = vmul.f32 %v659, 0.6931472
  %v661 = vsub.f32 %v637, %v654
  %v662 = vsub.f32 %v638, %v656
  %v663 = vsub.f32 %v639, %v658
  %v664 = vsub.f32 %v640, %v660
  %665 = vst [vmem:[%s10] sm:$0xff] %v621
  %666 = vst [vmem:[%s10 + $0x8] sm:$0xff] %v622
  %667 = vst [vmem:[%s10 + $0x10] sm:$0xff] %v623
  %668 = vst [vmem:[%s10 + $0x18] sm:$0xff] %v624
  %669 = vst [vmem:[%s11] sm:$0xff] %v661
  %670 = vst [vmem:[%s11 + $0x8] sm:$0xff] %v662
  %671 = vst [vmem:[%s11 + $0x10] sm:$0xff] %v663
  %672 = vst [vmem:[%s11 + $0x18] sm:$0xff] %v664
  // Predicated region
  $region42: #{sac_actor_forward.1} parent=0 // pred_check
    _
  $region43: #{sac_actor_forward.1} parent=0 // pred_check_branch
    %674 = sbr.rel (0) target = $region45
  $region44: #{sac_actor_forward.1} parent=0 // pred_region
    _
  $region45: #{sac_actor_forward.1} parent=0 // pred_fallthru
    _
  // Predicated region
  $region46: #{sac_actor_forward.1} parent=0 // pred_check
    _
  $region47: #{sac_actor_forward.1} parent=0 // pred_check_branch
    %676 = sbr.rel (0) target = $region49
  $region48: #{sac_actor_forward.1} parent=0 // pred_region
    _
  $region49: #{sac_actor_forward.1} parent=0 // pred_fallthru
    _
  // Predicated region
  $region50: #{sac_actor_forward.1} parent=0 // pred_check
    _
  $region51: #{sac_actor_forward.1} parent=0 // pred_check_branch
    %678 = sbr.rel (0) target = $region53
  $region52: #{sac_actor_forward.1} parent=0 // pred_region
    _
  $region53: #{sac_actor_forward.1} parent=0 // pred_fallthru
    _
  // Predicated region
  $region54: #{sac_actor_forward.1} parent=0 // pred_check
    _
  $region55: #{sac_actor_forward.1} parent=0 // pred_check_branch
    %680 = sbr.rel (0) target = $region57
  $region56: #{sac_actor_forward.1} parent=0 // pred_region
    _
  $region57: #{sac_actor_forward.1} parent=0 // pred_fallthru
    _

</llo_original>
